<compile_context>
chip_gen: v7x
topology: tpu7x:2x2x1
jax: 0.10.0
libtpu: 0.0.40
codegen_flags: <defaults>
</compile_context>

<pallas_src>
import functools

import jax
import jax.numpy as jnp
from jax import lax
from jax.experimental import pallas as pl
from jax.experimental.pallas import tpu as pltpu

_VMEM_CAP_BYTES = 56 * 1024 * 1024   # stay under v7x's 64 MiB physical VMEM
_ACC_BUDGET_BYTES = 4 * 1024 * 1024  # cap on the lane-wide f32 accumulator


def _classify_kernel(x_ref, w_ref, b_ref, o_ref, acc_ref, *,
                     hw, thw, acc_w, needs_mask):
    # x_ref: (TN, C1, THW)  w_ref: (C1, C2) f32  b_ref: (1, C2) f32
    # o_ref: (TN, 1, C2)    acc_ref: VMEM (TN, C1, ACC_W) f32
    j = pl.program_id(1)
    nj = pl.num_programs(1)
    tn, c1, _ = x_ref.shape
    nchunks = thw // acc_w

    @pl.when(j == 0)
    def _init():
        acc_ref[...] = jnp.zeros_like(acc_ref)

    def load_chunk(start, masked):
        v = x_ref[:, :, pl.ds(start, acc_w)].astype(jnp.float32)
        if masked:
            lane = lax.broadcasted_iota(jnp.int32, (tn, c1, acc_w), 2)
            gidx = j * thw + start + lane
            v = jnp.where(gidx < hw, v, jnp.float32(0))
        return v

    def accumulate(masked):
        if nchunks == 1:
            acc_ref[...] += load_chunk(0, masked)
        else:
            def body(k, a):
                start = pl.multiple_of(k * acc_w, acc_w)
                return a + load_chunk(start, masked)
            part = lax.fori_loop(0, nchunks, body,
                                 jnp.zeros(acc_ref.shape, jnp.float32),
                                 unroll=min(8, nchunks))
            acc_ref[...] += part

    if needs_mask:
        @pl.when(j < nj - 1)
        def _body():
            accumulate(False)

        @pl.when(j == nj - 1)
        def _tail():
            accumulate(True)
    else:
        accumulate(False)

    @pl.when(j == nj - 1)
    def _epilogue():
        # Single cross-lane reduce + relayout per batch tile (not per step).
        pooled = jnp.sum(acc_ref[...], axis=-1) * (1.0 / float(hw))   # (TN, C1)
        out = jnp.dot(pooled, w_ref[...], preferred_element_type=jnp.float32)
        out = out + b_ref[...]
        o_ref[...] = out.reshape(tn, 1, -1).astype(o_ref.dtype)


def _pick_hw_tile(hw, tn, c1, itemsize, budget):
    """Spatial tile: either the full H*W axis (when small), or the largest
    multiple of 128 under `budget`; trailing remainder handled by cdiv grid +
    in-kernel masking (never a whole-axis fallback)."""
    full_bytes = tn * c1 * hw * itemsize
    if full_bytes <= budget and (hw % 128 == 0 or full_bytes <= (1 << 20)):
        return hw
    lanes = max((budget // max(tn * c1 * itemsize, 1)) // 128 * 128, 128)
    hw_padded = ((hw + 127) // 128) * 128
    return min(lanes, hw_padded)


def _pick_acc_width(thw, tn, c1):
    """Lane width of the f32 accumulator (element-wise adds in the hot loop)."""
    if thw % 128 != 0:
        return thw                               # small ragged full-HW tile
    for cand in (512, 256, 128):
        if thw % cand == 0 and tn * c1 * cand * 4 <= _ACC_BUDGET_BYTES:
            return cand
    return 128


def classify_forward(x, conv_w, conv_b=None, *,
                     hw_tile_budget_bytes=8 * 1024 * 1024):
    """Classify forward pass.

    x:       (N, C1, H, W)
    conv_w:  (C2, C1, kh, kw) PyTorch conv weight; post-pool input is 1x1 so
             only the centre tap contributes under autopad.
    conv_b:  (C2,) or None
    returns: (N, C2)
    """
    N, C1, H, W = x.shape
    C2, C1w, kh, kw = conv_w.shape
    assert C1w == C1, "grouped conv (g > 1) not supported"
    HW = H * W

    # 1x1-equivalent weight, (C1, C2), pre-cast to f32 for the epilogue matmul.
    w2 = conv_w[:, :, kh // 2, kw // 2].T.astype(jnp.float32)        # (C1, C2)
    if conv_b is None:
        b2 = jnp.zeros((1, C2), jnp.float32)
    else:
        b2 = conv_b.reshape(1, C2).astype(jnp.float32)

    x3 = x.reshape(N, C1, HW)

    # Batch tile: keep grid[0] >= 2 when N >= 2 so the "parallel" axis can be
    # sharded across both v7x TensorCores. (Leading dim -> no sublane constraint.)
    TN = 1 if N <= 1 else min(8, (N + 1) // 2)
    # TODO(synk): for N == 1 the whole pooling stream runs on one v7x core; a
    # spatial split into an outer parallel axis + tiny XLA epilogue would fix it.

    itemsize = jnp.dtype(x.dtype).itemsize
    w_bytes = C1 * C2 * 4
    # Keep 2 x (x block) + acc + weights comfortably inside v7x VMEM.
    eff_budget = min(
        hw_tile_budget_bytes,
        max((_VMEM_CAP_BYTES - 2 * w_bytes - _ACC_BUDGET_BYTES - (2 << 20)) // 2,
            1 << 20),
    )
    THW = _pick_hw_tile(HW, TN, C1, itemsize, eff_budget)
    ACC_W = _pick_acc_width(THW, TN, C1)

    grid = (pl.cdiv(N, TN), pl.cdiv(HW, THW))
    needs_mask = (THW != HW) and (HW % THW != 0)

    block_bytes = TN * C1 * THW * itemsize
    acc_bytes = TN * C1 * ACC_W * 4
    vmem_limit = 2 * block_bytes + acc_bytes + 2 * w_bytes + (2 << 20)
    vmem_limit = int(min(max(vmem_limit, 32 << 20), _VMEM_CAP_BYTES))

    kernel = functools.partial(_classify_kernel, hw=HW, thw=THW,
                               acc_w=ACC_W, needs_mask=needs_mask)

    cost = pl.CostEstimate(
        flops=N * C1 * HW + 2 * N * C1 * C2,
        transcendentals=0,
        bytes_accessed=N * C1 * HW * itemsize + (C1 * C2 + C2) * 4
                       + N * C2 * itemsize,
    )

    out3 = pl.pallas_call(
        kernel,
        out_shape=jax.ShapeDtypeStruct((N, 1, C2), x.dtype),
        grid_spec=pltpu.PrefetchScalarGridSpec(
            num_scalar_prefetch=0,
            grid=grid,
            in_specs=[
                pl.BlockSpec((TN, C1, THW), lambda i, j: (i, 0, j)),  # x tiles
                pl.BlockSpec((C1, C2), lambda i, j: (0, 0)),          # weight
                pl.BlockSpec((1, C2), lambda i, j: (0, 0)),           # bias
            ],
            out_specs=pl.BlockSpec((TN, 1, C2), lambda i, j: (i, 0, 0)),
            scratch_shapes=[pltpu.VMEM((TN, C1, ACC_W), jnp.float32)],
        ),
        compiler_params=pltpu.CompilerParams(
            dimension_semantics=("parallel", "arbitrary"),
            vmem_limit_bytes=vmem_limit,
        ),
        cost_estimate=cost,
    )(x3, w2, b2)

    return out3.reshape(N, C2)


def _reference(x, conv_w, conv_b):
    pooled = jnp.mean(x.astype(jnp.float32), axis=(2, 3))             # (N, C1)
    kh, kw = conv_w.shape[2], conv_w.shape[3]
    w2 = conv_w[:, :, kh // 2, kw // 2].astype(jnp.float32)           # (C2, C1)
    out = jnp.dot(pooled, w2.T)
    b = (jnp.zeros((conv_w.shape[0],), jnp.float32) if conv_b is None
         else conv_b.astype(jnp.float32))
    return (out + b).astype(x.dtype)


def _check(x, conv_w, conv_b, **kw):
    out = classify_forward(x, conv_w, conv_b, **kw)
    jax.block_until_ready(out)
    ref = _reference(x, conv_w, conv_b)
    assert out.shape == ref.shape
    assert jnp.allclose(out, ref, atol=1e-3, rtol=1e-3), (
        f"max abs err {jnp.max(jnp.abs(out - ref))}")
    return out


if __name__ == "__main__":
    key = jax.random.PRNGKey(0)
    kx, kw_, kb, kx2 = jax.random.split(key, 4)

    # Main small test: N=2, C1=4, 16x16 spatial, C2=8.
    N, C1, H, W = 2, 4, 16, 16
    C2 = 8
    x = jax.random.normal(kx, (N, C1, H, W), dtype=jnp.float32)
    conv_w = jax.random.normal(kw_, (C2, C1, 1, 1), dtype=jnp.float32) * 0.1
    conv_b = jax.random.normal(kb, (C2,), dtype=jnp.float32) * 0.1
    _check(x, conv_w, conv_b)

    # Second small test: non-128-aligned H*W with a tiny tile budget to exercise
    # the cdiv grid, in-kernel lane masking and the chunked accumulator loop.
    x2 = jax.random.normal(kx2, (N, C1, 40, 40), dtype=jnp.float32)
    _check(x2, conv_w, conv_b, hw_tile_budget_bytes=16 * 1024)

    print("KERNEL_OK")
</pallas_src>

<mosaic_0001>
module attributes {stable_mosaic.version = 11 : i64} {
  func.func @_classify_kernel(%arg0: i32, %arg1: i32, %arg2: memref<1x4x256xf32, #tpu.memory_space<vmem>>, %arg3: memref<4x8xf32, #tpu.memory_space<vmem>>, %arg4: memref<1x8xf32, #tpu.memory_space<vmem>>, %arg5: memref<1x1x8xf32, #tpu.memory_space<vmem>>, %arg6: memref<1x4x256xf32, #tpu.memory_space<vmem>>) attributes {dimension_semantics = [#tpu.dimension_semantics<parallel>, #tpu.dimension_semantics<arbitrary>], iteration_bounds = array<i64: 2, 1>, scalar_prefetch = 0 : i64, scratch_operands = 1 : i64, tpu.core_type = #tpu.core_type<tc>, window_params = [{transform_indices = @transform_0, window_bounds = array<i64: 1, 4, 256>}, {pipeline_mode = #tpu.pipeline_mode<synchronous>, transform_indices = @transform_1, window_bounds = array<i64: 4, 8>}, {pipeline_mode = #tpu.pipeline_mode<synchronous>, transform_indices = @transform_2, window_bounds = array<i64: 1, 8>}, {transform_indices = @transform_3, window_bounds = array<i64: 1, 1, 8>}]} {
    %c0_i32 = arith.constant 0 : i32
    %0 = arith.cmpi eq, %arg1, %c0_i32 : i32
    %1 = arith.extui %0 : i1 to i32
    %c0_i32_0 = arith.constant 0 : i32
    %2 = arith.cmpi ne, %1, %c0_i32_0 : i32
    scf.if %2 {
      %cst = arith.constant 0.000000e+00 : f32
      %10 = vector.broadcast %cst : f32 to vector<1x4x256xf32>
      %c0_11 = arith.constant 0 : index
      %c0_12 = arith.constant 0 : index
      %c0_13 = arith.constant 0 : index
      %11 = vector.load %arg6[%c0_11, %c0_12, %c0_13] : memref<1x4x256xf32, #tpu.memory_space<vmem>>, vector<1x4x256xf32>
      tpu.vector_store %arg6[%c0_11, %c0_12, %c0_13], %10 {strides = array<i32>} : memref<1x4x256xf32, #tpu.memory_space<vmem>>, vector<1x4x256xf32>,
    } else {
    }
    %c0 = arith.constant 0 : index
    %c0_1 = arith.constant 0 : index
    %c0_2 = arith.constant 0 : index
    %3 = vector.load %arg6[%c0, %c0_1, %c0_2] : memref<1x4x256xf32, #tpu.memory_space<vmem>>, vector<1x4x256xf32>
    %c0_3 = arith.constant 0 : index
    %c0_4 = arith.constant 0 : index
    %c0_5 = arith.constant 0 : index
    %4 = vector.load %arg2[%c0_3, %c0_4, %c0_5] : memref<1x4x256xf32, #tpu.memory_space<vmem>>, vector<1x4x256xf32>
    %5 = arith.addf %3, %4 : vector<1x4x256xf32>
    %c0_6 = arith.constant 0 : index
    %c0_7 = arith.constant 0 : index
    %c0_8 = arith.constant 0 : index
    %6 = vector.load %arg6[%c0_6, %c0_7, %c0_8] : memref<1x4x256xf32, #tpu.memory_space<vmem>>, vector<1x4x256xf32>
    tpu.vector_store %arg6[%c0_6, %c0_7, %c0_8], %5 {strides = array<i32>} : memref<1x4x256xf32, #tpu.memory_space<vmem>>, vector<1x4x256xf32>,
    %c0_i32_9 = arith.constant 0 : i32
    %7 = arith.cmpi eq, %arg1, %c0_i32_9 : i32
    %8 = arith.extui %7 : i1 to i32
    %c0_i32_10 = arith.constant 0 : i32
    %9 = arith.cmpi ne, %8, %c0_i32_10 : i32
    scf.if %9 {
      %c0_11 = arith.constant 0 : index
      %c0_12 = arith.constant 0 : index
      %c0_13 = arith.constant 0 : index
      %10 = vector.load %arg6[%c0_11, %c0_12, %c0_13] : memref<1x4x256xf32, #tpu.memory_space<vmem>>, vector<1x4x256xf32>
      %cst = arith.constant dense<0.000000e+00> : vector<1x4xf32>
      %11 = vector.multi_reduction <add>, %10, %cst [2] : vector<1x4x256xf32> to vector<1x4xf32>
      %cst_14 = arith.constant 3.906250e-03 : f32
      %12 = vector.broadcast %cst_14 : f32 to vector<1x4xf32>
      %13 = arith.mulf %11, %12 : vector<1x4xf32>
      %c0_15 = arith.constant 0 : index
      %c0_16 = arith.constant 0 : index
      %14 = vector.load %arg3[%c0_15, %c0_16] : memref<4x8xf32, #tpu.memory_space<vmem>>, vector<4x8xf32>
      %cst_17 = arith.constant dense<0.000000e+00> : vector<1x8xf32>
      %15 = tpu.matmul %13, %14, %cst_17 {dimension_numbers = #tpu.dot_dimension_numbers<[1], [0], [0], [1], [0, 0, 1, 1], [], []>} : vector<1x4xf32>, vector<4x8xf32>, vector<1x8xf32> -> vector<1x8xf32>
      %c0_18 = arith.constant 0 : index
      %c0_19 = arith.constant 0 : index
      %16 = vector.load %arg4[%c0_18, %c0_19] : memref<1x8xf32, #tpu.memory_space<vmem>>, vector<1x8xf32>
      %17 = arith.addf %15, %16 : vector<1x8xf32>
      %18 = vector.shape_cast %17 : vector<1x8xf32> to vector<1x1x8xf32>
      %c0_20 = arith.constant 0 : index
      %c0_21 = arith.constant 0 : index
      %c0_22 = arith.constant 0 : index
      %19 = vector.load %arg5[%c0_20, %c0_21, %c0_22] : memref<1x1x8xf32, #tpu.memory_space<vmem>>, vector<1x1x8xf32>
      tpu.vector_store %arg5[%c0_20, %c0_21, %c0_22], %18 {strides = array<i32>} : memref<1x1x8xf32, #tpu.memory_space<vmem>>, vector<1x1x8xf32>,
    } else {
    }
    return
  }
  func.func @transform_0(%arg0: i32, %arg1: i32) -> (i32, i32, i32) {
    %c0_i32 = arith.constant 0 : i32
    %c0_i32_0 = arith.constant 0 : i32
    return %arg0, %c0_i32, %arg1 : i32, i32, i32
  }
  func.func @transform_1(%arg0: i32, %arg1: i32) -> (i32, i32) {
    %c0_i32 = arith.constant 0 : i32
    %c0_i32_0 = arith.constant 0 : i32
    %c0_i32_1 = arith.constant 0 : i32
    return %c0_i32, %c0_i32_0 : i32, i32
  }
  func.func @transform_2(%arg0: i32, %arg1: i32) -> (i32, i32) {
    %c0_i32 = arith.constant 0 : i32
    %c0_i32_0 = arith.constant 0 : i32
    %c0_i32_1 = arith.constant 0 : i32
    return %c0_i32, %c0_i32_0 : i32, i32
  }
  func.func @transform_3(%arg0: i32, %arg1: i32) -> (i32, i32, i32) {
    %c0_i32 = arith.constant 0 : i32
    %c0_i32_0 = arith.constant 0 : i32
    %c0_i32_1 = arith.constant 0 : i32
    return %arg0, %c0_i32, %c0_i32_0 : i32, i32, i32
  }
}

</mosaic_0001>

<llo_original>
// kernel: tpu_custom_call.1
$region0: #{tpu_custom_call.1}
  #allocation0 [shape = 'u32[]', space=smem, size = 0x4, offset = 0x4, fixed_abs, tag = 'smem constant byte address 0x4 - core index']
  #allocation1 [shape = 'u32[144,128]{1,0:T(1,128)}', space=vmem, size = 0x12000, scoped, tag = 'internal scratch']
  #allocation2 [shape = 'f32[1,4,256]{2,1,0:T(4,128)}', space=vmem, size = 0x1000, scoped, tag = 'scratch operand']
  %s0 = inlined_call_operand.hbm [shape: f32[2,4,256], index: 0, kind: input, shape index: {}]
  %s1 = inlined_call_operand.hbm [shape: f32[4,8], index: 1, kind: input, shape index: {}]
  %s2 = inlined_call_operand.vmem [shape: f32[1,8], index: 2, kind: input, shape index: {}]
  %s3 = inlined_call_operand.hbm [shape: f32[2,1,8], index: 3, kind: output, shape index: {}]
  %s4 = sld [smem:[#allocation0]]
  $region61: #{tpu_custom_call.1} parent=0
    _
  %s6 = ssub.s32 1, %s4
  %s7 = scalar_select 0, %s6, %s4
  $region1: #{tpu_custom_call.1} parent=0
    #allocation3 [shape = 'u8[8192]{0}', space=vmem, size = 0x2000, scoped, tag = 'input window, operand 0']
    #allocation4 [shape = 's32[2]{0}', space=sflag, size = 0x8, scoped, tag = 'scoped memory for tpu_custom_call.1']
    #allocation5 [shape = 's32[2]{0}', space=sflag, size = 0x8, scoped, tag = 'scoped memory for tpu_custom_call.1']
    #allocation6 [shape = 'u8[2048]{0}', space=vmem, size = 0x800, scoped, tag = 'input window, operand 1, single buffered']
    #allocation7 [shape = 's32[1]{0}', space=sflag, size = 0x4, scoped, tag = 'scoped memory for tpu_custom_call.1']
    #allocation8 [shape = 'u8[1024]{0}', space=vmem, size = 0x400, scoped, tag = 'output window, operand 0']
    %8 = vsyncpa [#allocation4], 0
    %s9 = scalar_lea.sflag [#allocation4], 1
    %10 = vsyncpa %s9, 0
    %11 = vsyncpa [#allocation7], 0
    %12 = vsyncpa [#allocation5], 0
    %s13 = scalar_lea.sflag [#allocation5], 1
    %14 = vsyncpa %s13, 0
    loop: start=0, step=1, limit=4
    $region2: #{tpu_custom_call.1} parent=1 // loop_pre_header
      _
    $region3: #{tpu_custom_call.1} parent=1 // loop_header
      %s16 = sphi 0, %s20
      %p17 = scmp.ge.s32.totalorder %s16, 4
      %s23 = sphi 0, %s35
      %s24 = sphi 0, %s31
      %s25 = sphi 0, %s23
      %s26 = sphi 0, %s24
      %s27 = sphi 0, %s25
      %s28 = sphi 0, %s26
      %s40 = sphi 0, %s42
      %s43 = sphi 0, %s40
      %s44 = sphi 0, %s43
      %s60 = sphi 0, %s44
      %s64 = sphi 0, %s64
      %s66 = sphi 0, %s64
      %s67 = sphi 0, %s66
      %s81 = sphi 0, %s67
      %s85 = sphi 0, %s85
      %s87 = sphi 0, %s85
      %s88 = sphi 0, %s87
      %s102 = sphi 0, %s88
      %s108 = sphi 0, %s110
      %s111 = sphi 0, %s108
      %s112 = sphi 0, %s111
      %s128 = sphi 0, %s112
    $region4: #{tpu_custom_call.1} parent=1 // loop_header_branch
      %19 = sbr.rel (%p17) target = $region8
    $region5: #{tpu_custom_call.1} parent=1 // loop_body
      %s21 = ssub.s32 %s16, 1
      %s22 = ssub.s32 %s16, 2
      %s29 = sadd.s32 1, %s24
      %p30 = scmp.ge.s32.totalorder %s29, 1
      %s31 = scalar_select %p30, 0, %s29
      %s32 = sadd.s32 1, %s23
      %s33 = scalar_select %p30, %s32, %s23
      %p34 = scmp.ge.s32.totalorder %s33, 2
      %s35 = scalar_select %p34, 0, %s33
      %s36 = ssub.s32 %s23, %s35
      %s37 = ssub.s32 %s24, %s31
      %s38 = sor.u32 %s36, %s37
      %p39 = scmp.eq.s32.totalorder %s38, 0
      %s41 = sadd.s32 %s40, 1
      %s42 = scalar_select %p39, %s40, %s41
      %p45 = pneg %p39
      %p46 = scmp.eq.s32.totalorder %s16, 1
      %p47 = por %p45, %p46
      %p48 = scmp.ne.s32.totalorder %s40, %s43
      %p49 = scmp.eq.s32.totalorder %s16, 0
      %p50 = por %p48, %p49
      %p51 = scmp.ne.s32.totalorder %s40, %s43
      %p52 = scmp.eq.s32.totalorder %s21, 1
      %p53 = por %p51, %p52
      %p54 = scmp.ne.s32.totalorder %s43, %s44
      %p55 = scmp.eq.s32.totalorder %s21, 0
      %p56 = por %p54, %p55
      %p57 = scmp.ne.s32.totalorder %s43, %s44
      %p58 = scmp.eq.s32.totalorder %s22, 1
      %p59 = por %p57, %p58
      %p61 = scmp.ne.s32.totalorder %s44, %s60
      %p62 = scmp.eq.s32.totalorder %s22, 0
      %p63 = por %p61, %p62
      %s65 = sadd.s32 %s64, 1
      %p68 = scmp.eq.s32.totalorder %s16, 1
      %p69 = scmp.ne.s32.totalorder %s64, %s66
      %p70 = scmp.eq.s32.totalorder %s16, 0
      %p71 = por %p69, %p70
      %p72 = scmp.ne.s32.totalorder %s64, %s66
      %p73 = scmp.eq.s32.totalorder %s21, 1
      %p74 = por %p72, %p73
      %p75 = scmp.ne.s32.totalorder %s66, %s67
      %p76 = scmp.eq.s32.totalorder %s21, 0
      %p77 = por %p75, %p76
      %p78 = scmp.ne.s32.totalorder %s66, %s67
      %p79 = scmp.eq.s32.totalorder %s22, 1
      %p80 = por %p78, %p79
      %p82 = scmp.ne.s32.totalorder %s67, %s81
      %p83 = scmp.eq.s32.totalorder %s22, 0
      %p84 = por %p82, %p83
      %s86 = sadd.s32 %s85, 1
      %p89 = scmp.eq.s32.totalorder %s16, 1
      %p90 = scmp.ne.s32.totalorder %s85, %s87
      %p91 = scmp.eq.s32.totalorder %s16, 0
      %p92 = por %p90, %p91
      %p93 = scmp.ne.s32.totalorder %s85, %s87
      %p94 = scmp.eq.s32.totalorder %s21, 1
      %p95 = por %p93, %p94
      %p96 = scmp.ne.s32.totalorder %s87, %s88
      %p97 = scmp.eq.s32.totalorder %s21, 0
      %p98 = por %p96, %p97
      %p99 = scmp.ne.s32.totalorder %s87, %s88
      %p100 = scmp.eq.s32.totalorder %s22, 1
      %p101 = por %p99, %p100
      %p103 = scmp.ne.s32.totalorder %s88, %s102
      %p104 = scmp.eq.s32.totalorder %s22, 0
      %p105 = por %p103, %p104
      %s106 = ssub.s32 %s23, %s35
      %p107 = scmp.eq.s32.totalorder %s106, 0
      %s109 = sadd.s32 %s108, 1
      %s110 = scalar_select %p107, %s108, %s109
      %p113 = pneg %p107
      %p114 = scmp.eq.s32.totalorder %s16, 1
      %p115 = por %p113, %p114
      %p116 = scmp.ne.s32.totalorder %s108, %s111
      %p117 = scmp.eq.s32.totalorder %s16, 0
      %p118 = por %p116, %p117
      %p119 = scmp.ne.s32.totalorder %s108, %s111
      %p120 = scmp.eq.s32.totalorder %s21, 1
      %p121 = por %p119, %p120
      %p122 = scmp.ne.s32.totalorder %s111, %s112
      %p123 = scmp.eq.s32.totalorder %s21, 0
      %p124 = por %p122, %p123
      %p125 = scmp.ne.s32.totalorder %s111, %s112
      %p126 = scmp.eq.s32.totalorder %s22, 1
      %p127 = por %p125, %p126
      %p129 = scmp.ne.s32.totalorder %s112, %s128
      %p130 = scmp.eq.s32.totalorder %s22, 0
      %p131 = por %p129, %p130
      %p132 = scmp.le.s32.totalorder 1, %s16
      %p133 = scmp.lt.s32.totalorder %s16, 3
      %p134 = pnand %p132, %p133
      %p135 = pneg %p134
      // Predicated region
      $region9: #{tpu_custom_call.1} parent=5 // pred_check
        _
      $region10: #{tpu_custom_call.1} parent=5 // pred_check_branch
        %137 = sbr.rel (%p134) target = $region12
      $region11: #{tpu_custom_call.1} parent=5 // pred_region
        %s138 = ssub.s32 %s16, 1
        // Predicated region
        $region13: #{tpu_custom_call.1} parent=11 // pred_check
          %p139 = pneg %p77
        $region14: #{tpu_custom_call.1} parent=11 // pred_check_branch
          %141 = sbr.rel (%p139) target = $region16
        $region15: #{tpu_custom_call.1} parent=11 // pred_region
          %s143 = ssub.s32 64, 64
          %144 = vsyncadd [#allocation7], %s143
          %s146 = sshll.u32 [#allocation6], 4
          %s147 = int_to_ptr.vmem [resolvable:$true] %s146
          %149 = dma.hbm_to_vmem [thread:$0]  %s1, 64, %s147, [#allocation7]
        $region16: #{tpu_custom_call.1} parent=11 // pred_fallthru
          _
        // Predicated region
        $region17: #{tpu_custom_call.1} parent=11 // pred_check
          %p150 = pneg %p98
        $region18: #{tpu_custom_call.1} parent=11 // pred_check_branch
          %152 = sbr.rel (%p150) target = $region20
        $region19: #{tpu_custom_call.1} parent=11 // pred_region
          _
        $region20: #{tpu_custom_call.1} parent=11 // pred_fallthru
          _
      $region12: #{tpu_custom_call.1} parent=5 // pred_fallthru
        _
      %p153 = scmp.lt.s32.totalorder %s16, 2
      // Predicated region
      $region21: #{tpu_custom_call.1} parent=5 // pred_check
        %p154 = pneg %p153
      $region22: #{tpu_custom_call.1} parent=5 // pred_check_branch
        %156 = sbr.rel (%p154) target = $region24
      $region23: #{tpu_custom_call.1} parent=5 // pred_region
        // Predicated region
        $region25: #{tpu_custom_call.1} parent=23 // pred_check
          %p157 = pneg %p50
        $region26: #{tpu_custom_call.1} parent=23 // pred_check_branch
          %159 = sbr.rel (%p157) target = $region28
        $region27: #{tpu_custom_call.1} parent=23 // pred_region
          %s160 = sand.u32 %s40, 1
          %s161 = scalar_lea.sflag [#allocation4], %s160
          %s162 = sand.u32 %s40, 1
          %s163 = smul.addr %s162, 8
          %s164 = scalar_lea.vmem [#allocation3], %s163
          %s165 = smul.u32 2, %s24
          %s167 = ssub.s32 128, 128
          %168 = vsyncadd %s161, %s167
          %s169 = smul.addr %s23, 2
          %s170 = sadd.s32 %s165, %s169
          %s171 = smul.addr %s170, 64
          %s172 = scalar_lea.hbm %s0, %s171
          %s174 = sshll.u32 %s164, 4
          %s175 = int_to_ptr.vmem [resolvable:$true] %s174
          %177 = dma.hbm_to_vmem [thread:$0]  %s172, 128, %s175, %s161
        $region28: #{tpu_custom_call.1} parent=23 // pred_fallthru
          _
      $region24: #{tpu_custom_call.1} parent=5 // pred_fallthru
        _
      %p178 = scmp.le.s32.totalorder 1, %s16
      %p179 = scmp.lt.s32.totalorder %s16, 3
      %p180 = pnand %p178, %p179
      %p181 = pneg %p180
      // Predicated region
      $region29: #{tpu_custom_call.1} parent=5 // pred_check
        _
      $region30: #{tpu_custom_call.1} parent=5 // pred_check_branch
        %183 = sbr.rel (%p180) target = $region32
      $region31: #{tpu_custom_call.1} parent=5 // pred_region
        %s184 = ssub.s32 %s16, 1
        %s185 = sand.u32 %s43, 1
        %s186 = scalar_lea.sflag [#allocation4], %s185
        %s187 = sand.u32 %s43, 1
        %s188 = smul.addr %s187, 8
        %s189 = scalar_lea.vmem [#allocation3], %s188
        // Predicated region
        $region33: #{tpu_custom_call.1} parent=31 // pred_check
          %p190 = pneg %p56
        $region34: #{tpu_custom_call.1} parent=31 // pred_check_branch
          %192 = sbr.rel (%p190) target = $region36
        $region35: #{tpu_custom_call.1} parent=31 // pred_region
          %193 = dma.done %s186, 128
        $region36: #{tpu_custom_call.1} parent=31 // pred_fallthru
          _
        // Predicated region
        $region37: #{tpu_custom_call.1} parent=31 // pred_check
          %p194 = pneg %p77
        $region38: #{tpu_custom_call.1} parent=31 // pred_check_branch
          %196 = sbr.rel (%p194) target = $region40
        $region39: #{tpu_custom_call.1} parent=31 // pred_region
          %197 = dma.done [#allocation7], 64
        $region40: #{tpu_custom_call.1} parent=31 // pred_fallthru
          _
        %s198 = sand.u32 %s43, 1
        %s199 = scalar_lea.sflag [#allocation4], %s198
        %s200 = sand.u32 %s43, 1
        %s201 = smul.addr %s200, 8
        %s202 = scalar_lea.vmem [#allocation3], %s201
        %p203 = pneg %p56
        %p204 = pneg %p53
        %p205 = pneg %p77
        %p206 = pneg %p74
        %p207 = pneg %p98
        %p208 = pneg %p95
        %p209 = pneg %p124
        %p210 = pneg %p121
        %s211 = sand.u32 %s111, 1
        %s212 = scalar_lea.sflag [#allocation5], %s211
        %s213 = sand.u32 %s111, 1
        %s214 = scalar_lea.vmem [#allocation8], %s213
        %s215 = smul.u32 2, %s26
        %p216 = scmp.eq.s32.totalorder %s26, 0
        // Predicated region
        $region41: #{tpu_custom_call.1} parent=31 // pred_check
          %p217 = pneg %p216
        $region42: #{tpu_custom_call.1} parent=31 // pred_check_branch
          %219 = sbr.rel (%p217) target = $region44
        $region43: #{tpu_custom_call.1} parent=31 // pred_region
          %220 = vst [vmem:[#allocation2] sm:$0xff] 0.0
        $region44: #{tpu_custom_call.1} parent=31 // pred_fallthru
          _
        %v221 = vld [vmem:[#allocation2] sm:$0xff]
        %v222 = vld [vmem:[%s189] sm:$0xff]
        %v223 = vadd.f32 %v221, %v222
        %224 = vst [vmem:[#allocation2] sm:$0xff] %v223
        // Predicated region
        $region45: #{tpu_custom_call.1} parent=31 // pred_check
          %p225 = pneg %p216
        $region46: #{tpu_custom_call.1} parent=31 // pred_check_branch
          %227 = sbr.rel (%p225) target = $region48
        $region47: #{tpu_custom_call.1} parent=31 // pred_region
          %v228 = vld [vmem:[#allocation2] sm:$0xff]
          %v230 = vcombine.high %v228, %v228
          %vm232 = vcmask 1043456
          %v233 = vsel %vm232, %v228, 0.0
          %v234 = vsel %vm232, %v230, 0.0
          %v235 = vadd.f32 %v233, %v234
          %236 = vadd.xlane.f32.xlu0 %v235
          %v237 = vpop.xlane.xlu0 %236
          %v238 = vmul.f32 %v237, 0.00390625
          %v239 = vld [vmem:[#allocation6] sm:$0xf]
          %v240 = vld [vmem:[%s2] sm:$0x1]
          %v242 = vlaneseq
          %v243 = vand.u32 %v242, 127
          %v244 = vlaneseq
          %v245 = vshrl.u32 %v244, 7
          %v246 = vsub.s32 %v243, %v245
          %v247 = vrot.slane %v238, %v246
          %vm248 = vcmask 31744
          %v249 = vsel %vm248, %v247, 0
          %v252 = vsel %vm232, %v239, 0
          %254 = vmatprep.subr.mxu0 0.0
          %255 = vmatpush1.msra.mxu0 %v252
          %256 = vmatprep.subr.mxu0 0.0
          %257 = vmatpush1.msra.mxu0 0.0
          %258 = vmatprep.subr.mxu0 0.0
          %259 = vmatpush1.msra.mxu0 0.0
          %260 = vmatprep.subr.mxu0 0.0
          %261 = vmatpush1.msra.mxu0 0.0
          %262 = vmatprep.subr.mxu0 0.0
          %263 = vmatpush1.msra.mxu0 0.0
          %264 = vmatprep.subr.mxu0 0.0
          %265 = vmatpush1.msra.mxu0 0.0
          %266 = vmatprep.subr.mxu0 0.0
          %267 = vmatpush1.msra.mxu0 0.0
          %268 = vmatprep.subr.mxu0 0.0
          %269 = vmatpush1.msra.mxu0 0.0
          %270 = vmatprep.subr.mxu0 0.0
          %271 = vmatpush1.msra.mxu0 0.0
          %272 = vmatprep.subr.mxu0 0.0
          %273 = vmatpush1.msra.mxu0 0.0
          %274 = vmatprep.subr.mxu0 0.0
          %275 = vmatpush1.msra.mxu0 0.0
          %276 = vmatprep.subr.mxu0 0.0
          %277 = vmatpush1.msra.mxu0 0.0
          %278 = vmatprep.subr.mxu0 0.0
          %279 = vmatpush1.msra.mxu0 0.0
          %280 = vmatprep.subr.mxu0 0.0
          %281 = vmatpush1.msra.mxu0 0.0
          %282 = vmatprep.subr.mxu0 0.0
          %283 = vmatpush1.msra.mxu0 0.0
          %284 = vmatprep.subr.mxu0 0.0
          %285 = vmatpush1.msra.mxu0 0.0
          %286 = vmatprep.subr.mxu0 0.0
          %287 = vmatpush1.msra.mxu0 0.0
          %288 = vmatprep.subr.mxu0 0.0
          %289 = vmatpush1.msra.mxu0 0.0
          %290 = vmatprep.subr.mxu0 0.0
          %291 = vmatpush1.msra.mxu0 0.0
          %292 = vmatprep.subr.mxu0 0.0
          %293 = vmatpush1.msra.mxu0 0.0
          %294 = vmatprep.subr.mxu0 0.0
          %295 = vmatpush1.msra.mxu0 0.0
          %296 = vmatprep.subr.mxu0 0.0
          %297 = vmatpush1.msra.mxu0 0.0
          %298 = vmatprep.subr.mxu0 0.0
          %299 = vmatpush1.msra.mxu0 0.0
          %300 = vmatprep.subr.mxu0 0.0
          %301 = vmatpush1.msra.mxu0 0.0
          %302 = vmatprep.subr.mxu0 0.0
          %303 = vmatpush1.msra.mxu0 0.0
          %304 = vmatprep.subr.mxu0 0.0
          %305 = vmatpush1.msra.mxu0 0.0
          %306 = vmatprep.subr.mxu0 0.0
          %307 = vmatpush1.msra.mxu0 0.0
          %308 = vmatprep.subr.mxu0 0.0
          %309 = vmatpush1.msra.mxu0 0.0
          %310 = vmatprep.subr.mxu0 0.0
          %311 = vmatpush1.msra.mxu0 0.0
          %312 = vmatprep.subr.mxu0 0.0
          %313 = vmatpush1.msra.mxu0 0.0
          %314 = vmatprep.subr.mxu0 0.0
          %315 = vmatpush1.msra.mxu0 0.0
          %316 = vmatprep.subr.mxu0 0.0
          %317 = vmatpush1.msra.mxu0 0.0
          %318 = vmatprep.mubr.f32.mxu0 0.0
          %319 = vmatmul.mubr.f32.gmra.mrb[0].mxu0 %v249
          %v320 = vpop.f32.mrb[0].mxu0
          %v321 = vadd.f32 %v240, %v320
          %v322 = vpop.f32.mrb[0].mxu0
          %323 = vdwg.mxu0
          %vm324 = vcmask 57344
          %325 = vst.msk [vmem:[%s214] sm:$0x1] %vm324, %v321
        $region48: #{tpu_custom_call.1} parent=31 // pred_fallthru
          _
        %s326 = sand.u32 %s111, 1
        %s327 = scalar_lea.sflag [#allocation5], %s326
        %s328 = sand.u32 %s111, 1
        %s329 = scalar_lea.vmem [#allocation8], %s328
        // Predicated region
        $region49: #{tpu_custom_call.1} parent=31 // pred_check
          %p330 = pneg %p121
        $region50: #{tpu_custom_call.1} parent=31 // pred_check_branch
          %332 = sbr.rel (%p330) target = $region52
        $region51: #{tpu_custom_call.1} parent=31 // pred_region
          %s334 = ssub.s32 16, 16
          %335 = vsyncadd %s327, %s334
          %s336 = smul.addr %s25, 16
          %s337 = scalar_lea.hbm %s3, %s336
          %s339 = sshll.u32 %s329, 4
          %s340 = int_to_ptr.vmem [resolvable:$true] %s339
          %342 = dma.vmem_to_hbm [thread:$0]  %s340, 16, %s337, %s327
        $region52: #{tpu_custom_call.1} parent=31 // pred_fallthru
          _
      $region32: #{tpu_custom_call.1} parent=5 // pred_fallthru
        _
      %p343 = scmp.le.s32.totalorder 2, %s16
      // Predicated region
      $region53: #{tpu_custom_call.1} parent=5 // pred_check
        %p344 = pneg %p343
      $region54: #{tpu_custom_call.1} parent=5 // pred_check_branch
        %346 = sbr.rel (%p344) target = $region56
      $region55: #{tpu_custom_call.1} parent=5 // pred_region
        %s347 = ssub.s32 %s16, 2
        // Predicated region
        $region57: #{tpu_custom_call.1} parent=55 // pred_check
          %p348 = pneg %p127
        $region58: #{tpu_custom_call.1} parent=55 // pred_check_branch
          %350 = sbr.rel (%p348) target = $region60
        $region59: #{tpu_custom_call.1} parent=55 // pred_region
          %s351 = sand.u32 %s112, 1
          %s352 = scalar_lea.sflag [#allocation5], %s351
          %s353 = sand.u32 %s112, 1
          %s354 = scalar_lea.vmem [#allocation8], %s353
          %355 = dma.done %s352, 16
        $region60: #{tpu_custom_call.1} parent=55 // pred_fallthru
          _
      $region56: #{tpu_custom_call.1} parent=5 // pred_fallthru
        _
    $region6: #{tpu_custom_call.1} parent=1 // loop_footer
      %s20 = sadd.s32 1, %s16
    $region7: #{tpu_custom_call.1} parent=1 // loop_footer_branch
      %15 = sbr.rel target = $region3
    $region8: #{tpu_custom_call.1} parent=1 // loop_exit
      _
    %356 = vsyncpa [#allocation4], 1
    %s357 = scalar_lea.sflag [#allocation4], 1
    %358 = vsyncpa %s357, 1
    %359 = vsyncpa [#allocation7], 1
    %360 = vsyncpa [#allocation5], 1
    %s361 = scalar_lea.sflag [#allocation5], 1
    %362 = vsyncpa %s361, 1

</llo_original>
